<compile_context>
chip_gen: v7x
topology: tpu7x:2x2x1
jax: 0.10.0
libtpu: 0.0.40
codegen_flags: <defaults>
</compile_context>

<pallas_src>
import math

import jax
import jax.numpy as jnp
from jax.experimental import pallas as pl
from jax.experimental.pallas import tpu as pltpu

_TB_DEFAULT = 4096  # batch-tile width (lanes); sweep 2048-8192 if tuning further


def _round_up(n, m):
    return ((n + m - 1) // m) * m


def policy_kernel(x_ref, w1_ref, w2d_ref, bd_ref, out_ref):
    # x_ref  : (5, TB)   rows 0..3 = features, row 4 = 1.0 (bias column); batch on lanes
    # w1_ref : (128, 5)  fc1.weight augmented with fc1.bias as last column
    # w2d_ref: (1, 128)  fc2.weight[0] - fc2.weight[1]
    # bd_ref : (1, 1)    fc2.bias[0]  - fc2.bias[1]
    # out_ref: (2, TB)   row 0 = P(action 0), row 1 = P(action 1)

    # fc1 (+bias, folded) + ReLU: h = relu(W1_aug @ x_aug) -> (128, TB)
    h = jnp.maximum(
        jnp.dot(w1_ref[...], x_ref[...], preferred_element_type=jnp.float32),
        0.0,
    )

    # fc2 collapsed to the logit difference: d = w2d @ h + bd -> (1, TB)
    d = jnp.dot(w2d_ref[...], h, preferred_element_type=jnp.float32) + bd_ref[...]

    # 2-class softmax == sigmoid(d), numerically stable exp(-|d|) form
    e = jnp.exp(-jnp.abs(d))                     # EUP slot
    sig = 1.0 / (1.0 + e)                        # sigmoid(|d|)
    p0 = jnp.where(d >= 0.0, sig, 1.0 - sig)     # sigmoid(d)

    # Single full-block store (avoids two 1-sublane masked stores).
    out_ref[...] = jnp.concatenate([p0, 1.0 - p0], axis=0).astype(out_ref.dtype)


def prepare_params(w1, b1, w2, b2):
    """Once-per-policy parameter repacking (PyTorch (out, in) layout in)."""
    w1_aug = jnp.concatenate([w1, b1.reshape(128, 1)], axis=1)  # (128, 5)
    w2d = w2[0:1, :] - w2[1:2, :]                               # (1, 128)
    bd = jnp.reshape(b2[0] - b2[1], (1, 1))                     # (1, 1)
    return w1_aug, w2d, bd


def prepare_input(x):
    """(B, 4) -> (5, b128) feature-major with a ones row; pad only to 128 lanes.

    Ideally the rollout producer emits this layout directly (then this op vanishes).
    """
    B = x.shape[0]
    b128 = _round_up(max(B, 1), 128)
    xt = jnp.pad(x.T, ((0, 0), (0, b128 - B)))                  # (4, b128)
    return jnp.concatenate([xt, jnp.ones((1, b128), x.dtype)], axis=0)


def policy_forward_fmajor(x_aug, w1_aug, w2d, bd, *, tb=_TB_DEFAULT):
    """Core path: x_aug (5, b_pad) with b_pad % 128 == 0 -> probs (2, b_pad)."""
    b_pad = x_aug.shape[1]
    tb = min(tb, b_pad)                    # adaptive tile; no padding to full tile
    grid = pl.cdiv(b_pad, tb)              # partial last tile handled by Pallas

    return pl.pallas_call(
        policy_kernel,
        out_shape=jax.ShapeDtypeStruct((2, b_pad), jnp.float32),
        grid_spec=pltpu.PrefetchScalarGridSpec(
            num_scalar_prefetch=0,
            grid=(grid,),
            in_specs=[
                pl.BlockSpec((5, tb), lambda i: (0, i)),      # x tiles: pipelined
                pl.BlockSpec((128, 5), lambda i: (0, 0)),     # weights: VMEM-resident
                pl.BlockSpec((1, 128), lambda i: (0, 0)),
                pl.BlockSpec((1, 1), lambda i: (0, 0)),
            ],
            out_specs=pl.BlockSpec((2, tb), lambda i: (0, i)),
        ),
        compiler_params=pltpu.CompilerParams(
            dimension_semantics=("parallel",)),   # shards tiles across v7x's 2 TCs
    )(x_aug, w1_aug, w2d, bd)


def policy_forward(x, w1, b1, w2, b2, *, tb=_TB_DEFAULT):
    """PyTorch-facing wrapper: x (B, 4) f32 -> (B, 2) softmax probs."""
    B = x.shape[0]
    w1_aug, w2d, bd = prepare_params(w1, b1, w2, b2)
    x_aug = prepare_input(x)
    out_t = policy_forward_fmajor(x_aug, w1_aug, w2d, bd, tb=tb)
    return out_t[:, :B].T


def init_params(key):
    """nn.Linear default init U(-1/sqrt(fan_in), +), PyTorch (out, in) layout."""
    k1, k2, k3, k4 = jax.random.split(key, 4)
    bound1 = 1.0 / math.sqrt(4.0)
    bound2 = 1.0 / math.sqrt(128.0)
    w1 = jax.random.uniform(k1, (128, 4), jnp.float32, -bound1, bound1)
    b1 = jax.random.uniform(k2, (128,), jnp.float32, -bound1, bound1)
    w2 = jax.random.uniform(k3, (2, 128), jnp.float32, -bound2, bound2)
    b2 = jax.random.uniform(k4, (2,), jnp.float32, -bound2, bound2)
    return w1, b1, w2, b2


def reference_forward(x, w1, b1, w2, b2):
    h = jnp.maximum(x @ w1.T + b1, 0.0)
    logits = h @ w2.T + b2
    return jax.nn.softmax(logits, axis=1)


if __name__ == "__main__":
    key = jax.random.PRNGKey(0)
    pkey, xkey, xkey2 = jax.random.split(key, 3)
    w1, b1, w2, b2 = init_params(pkey)

    fwd = jax.jit(policy_forward)

    # Small CartPole-like batch.
    batch = 8
    x = jax.random.normal(xkey, (batch, 4), jnp.float32)
    out = jax.block_until_ready(fwd(x, w1, b1, w2, b2))
    ref = reference_forward(x, w1, b1, w2, b2)
    assert out.shape == (batch, 2)
    assert jnp.allclose(out, ref, atol=1e-5, rtol=1e-5), "mismatch vs reference"
    assert jnp.allclose(jnp.sum(out, axis=1), 1.0, atol=1e-5), "rows must sum to 1"

    # Uneven batch to exercise the 128-lane padding path.
    batch2 = 300
    x2 = jax.random.normal(xkey2, (batch2, 4), jnp.float32)
    out2 = jax.block_until_ready(fwd(x2, w1, b1, w2, b2))
    ref2 = reference_forward(x2, w1, b1, w2, b2)
    assert out2.shape == (batch2, 2)
    assert jnp.allclose(out2, ref2, atol=1e-5, rtol=1e-5), "mismatch vs reference (B=300)"

    print("KERNEL_OK")
</pallas_src>

<mosaic_0001>
module attributes {stable_mosaic.version = 11 : i64} {
  func.func @policy_kernel(%arg0: i32, %arg1: memref<5x128xf32, #tpu.memory_space<vmem>>, %arg2: memref<128x5xf32, #tpu.memory_space<vmem>>, %arg3: memref<1x128xf32, #tpu.memory_space<vmem>>, %arg4: memref<1x1xf32, #tpu.memory_space<vmem>>, %arg5: memref<2x128xf32, #tpu.memory_space<vmem>>) attributes {dimension_semantics = [#tpu.dimension_semantics<parallel>], iteration_bounds = array<i64: 1>, scalar_prefetch = 0 : i64, scratch_operands = 0 : i64, tpu.core_type = #tpu.core_type<tc>, window_params = [{transform_indices = @transform_0, window_bounds = array<i64: 5, 128>}, {pipeline_mode = #tpu.pipeline_mode<synchronous>, transform_indices = @transform_1, window_bounds = array<i64: 128, 5>}, {pipeline_mode = #tpu.pipeline_mode<synchronous>, transform_indices = @transform_2, window_bounds = array<i64: 1, 128>}, {pipeline_mode = #tpu.pipeline_mode<synchronous>, transform_indices = @transform_3, window_bounds = array<i64: 1, 1>}, {transform_indices = @transform_4, window_bounds = array<i64: 2, 128>}]} {
    %c0 = arith.constant 0 : index
    %c0_0 = arith.constant 0 : index
    %0 = vector.load %arg2[%c0, %c0_0] : memref<128x5xf32, #tpu.memory_space<vmem>>, vector<128x5xf32>
    %c0_1 = arith.constant 0 : index
    %c0_2 = arith.constant 0 : index
    %1 = vector.load %arg1[%c0_1, %c0_2] : memref<5x128xf32, #tpu.memory_space<vmem>>, vector<5x128xf32>
    %cst = arith.constant dense<0.000000e+00> : vector<128x128xf32>
    %2 = tpu.matmul %0, %1, %cst {dimension_numbers = #tpu.dot_dimension_numbers<[1], [0], [0], [1], [0, 0, 1, 1], [], []>} : vector<128x5xf32>, vector<5x128xf32>, vector<128x128xf32> -> vector<128x128xf32>
    %cst_3 = arith.constant 0.000000e+00 : f32
    %3 = vector.broadcast %cst_3 : f32 to vector<128x128xf32>
    %4 = arith.maximumf %2, %3 : vector<128x128xf32>
    %c0_4 = arith.constant 0 : index
    %c0_5 = arith.constant 0 : index
    %5 = vector.load %arg3[%c0_4, %c0_5] : memref<1x128xf32, #tpu.memory_space<vmem>>, vector<1x128xf32>
    %cst_6 = arith.constant dense<0.000000e+00> : vector<1x128xf32>
    %6 = tpu.matmul %5, %4, %cst_6 {dimension_numbers = #tpu.dot_dimension_numbers<[1], [0], [0], [1], [0, 0, 1, 1], [], []>} : vector<1x128xf32>, vector<128x128xf32>, vector<1x128xf32> -> vector<1x128xf32>
    %c0_7 = arith.constant 0 : index
    %c0_8 = arith.constant 0 : index
    %7 = vector.load %arg4[%c0_7, %c0_8] : memref<1x1xf32, #tpu.memory_space<vmem>>, vector<1x1xf32>
    %8 = vector.broadcast %7 : vector<1x1xf32> to vector<1x128xf32>
    %9 = arith.addf %6, %8 : vector<1x128xf32>
    %10 = math.absf %9 : vector<1x128xf32>
    %cst_9 = arith.constant 0.000000e+00 : f32
    %11 = vector.broadcast %cst_9 : f32 to vector<1x128xf32>
    %12 = arith.subf %11, %10 : vector<1x128xf32>
    %13 = math.exp %12 : vector<1x128xf32>
    %cst_10 = arith.constant 1.000000e+00 : f32
    %14 = vector.broadcast %cst_10 : f32 to vector<1x128xf32>
    %15 = arith.addf %14, %13 : vector<1x128xf32>
    %cst_11 = arith.constant 1.000000e+00 : f32
    %16 = vector.broadcast %cst_11 : f32 to vector<1x128xf32>
    %17 = arith.divf %16, %15 : vector<1x128xf32>
    %cst_12 = arith.constant 0.000000e+00 : f32
    %18 = vector.broadcast %cst_12 : f32 to vector<1x128xf32>
    %19 = arith.cmpf oge, %9, %18 : vector<1x128xf32>
    %cst_13 = arith.constant 1.000000e+00 : f32
    %20 = vector.broadcast %cst_13 : f32 to vector<1x128xf32>
    %21 = arith.subf %20, %17 : vector<1x128xf32>
    %22 = arith.select %19, %17, %21 : vector<1x128xi1>, vector<1x128xf32>
    %cst_14 = arith.constant 1.000000e+00 : f32
    %23 = vector.broadcast %cst_14 : f32 to vector<1x128xf32>
    %24 = arith.subf %23, %22 : vector<1x128xf32>
    %25 = tpu.concatenate %22, %24 in 0 : vector<1x128xf32>, vector<1x128xf32> -> vector<2x128xf32>
    %c0_15 = arith.constant 0 : index
    %c0_16 = arith.constant 0 : index
    %26 = vector.load %arg5[%c0_15, %c0_16] : memref<2x128xf32, #tpu.memory_space<vmem>>, vector<2x128xf32>
    tpu.vector_store %arg5[%c0_15, %c0_16], %25 {strides = array<i32>} : memref<2x128xf32, #tpu.memory_space<vmem>>, vector<2x128xf32>,
    return
  }
  func.func @transform_0(%arg0: i32) -> (i32, i32) {
    %c0_i32 = arith.constant 0 : i32
    %c0_i32_0 = arith.constant 0 : i32
    return %c0_i32, %arg0 : i32, i32
  }
  func.func @transform_1(%arg0: i32) -> (i32, i32) {
    %c0_i32 = arith.constant 0 : i32
    %c0_i32_0 = arith.constant 0 : i32
    %c0_i32_1 = arith.constant 0 : i32
    return %c0_i32, %c0_i32_0 : i32, i32
  }
  func.func @transform_2(%arg0: i32) -> (i32, i32) {
    %c0_i32 = arith.constant 0 : i32
    %c0_i32_0 = arith.constant 0 : i32
    %c0_i32_1 = arith.constant 0 : i32
    return %c0_i32, %c0_i32_0 : i32, i32
  }
  func.func @transform_3(%arg0: i32) -> (i32, i32) {
    %c0_i32 = arith.constant 0 : i32
    %c0_i32_0 = arith.constant 0 : i32
    %c0_i32_1 = arith.constant 0 : i32
    return %c0_i32, %c0_i32_0 : i32, i32
  }
  func.func @transform_4(%arg0: i32) -> (i32, i32) {
    %c0_i32 = arith.constant 0 : i32
    %c0_i32_0 = arith.constant 0 : i32
    return %c0_i32, %arg0 : i32, i32
  }
}

</mosaic_0001>

<llo_original>
// kernel: policy_forward.1
$region0: #{policy_forward.1}
  #allocation0 [shape = 'u32[]', space=smem, size = 0x4, offset = 0x4, fixed_abs, tag = 'smem constant byte address 0x4 - core index']
  #allocation1 [shape = 'u32[144,128]{1,0:T(1,128)}', space=vmem, size = 0x12000, scoped, tag = 'internal scratch']
  #allocation2 [shape = 'f32[1,1]{1,0:T(1,128)S(1)}', space=vmem, size = 0x200, scoped, tag = 'scoped memory for policy_forward.1']
  %s0 = inlined_call_operand.vmem [shape: f32[5,128], index: 0, kind: input, shape index: {}]
  %s1 = inlined_call_operand.vmem [shape: f32[128,5], index: 1, kind: input, shape index: {}]
  %s2 = inlined_call_operand.vmem [shape: f32[1,128], index: 2, kind: input, shape index: {}]
  %s3 = inlined_call_operand.<no memory space> [shape: f32[1,1], index: 3, kind: input, shape index: {}]
  %s4 = inlined_call_operand.vmem [shape: f32[2,128], index: 4, kind: output, shape index: {}]
  %s5 = sld [smem:[#allocation0]]
  $region26: #{policy_forward.1} parent=0
    _
  %s7 = ssub.s32 1, %s5
  %s8 = scalar_select 0, %s7, %s5
  %v9 = vstv %s3
  %10 = vst [vmem:[#allocation2] sm:$0x1] %v9
  // Predicated region
  $region2: #{policy_forward.1} parent=0 // pred_check
    _
  $region3: #{policy_forward.1} parent=0 // pred_check_branch
    %12 = sbr.rel (0) target = $region5
  $region4: #{policy_forward.1} parent=0 // pred_region
    _
  $region5: #{policy_forward.1} parent=0 // pred_fallthru
    _
  // Predicated region
  $region6: #{policy_forward.1} parent=0 // pred_check
    _
  $region7: #{policy_forward.1} parent=0 // pred_check_branch
    %14 = sbr.rel (0) target = $region9
  $region8: #{policy_forward.1} parent=0 // pred_region
    _
  $region9: #{policy_forward.1} parent=0 // pred_fallthru
    _
  // Predicated region
  $region10: #{policy_forward.1} parent=0 // pred_check
    _
  $region11: #{policy_forward.1} parent=0 // pred_check_branch
    %16 = sbr.rel (0) target = $region13
  $region12: #{policy_forward.1} parent=0 // pred_region
    _
  $region13: #{policy_forward.1} parent=0 // pred_fallthru
    _
  // Predicated region
  $region14: #{policy_forward.1} parent=0 // pred_check
    _
  $region15: #{policy_forward.1} parent=0 // pred_check_branch
    %18 = sbr.rel (0) target = $region17
  $region16: #{policy_forward.1} parent=0 // pred_region
    _
  $region17: #{policy_forward.1} parent=0 // pred_fallthru
    _
  %v19 = vld [vmem:[%s1] sm:$0xff]
  %v20 = vld [vmem:[%s1 + $0x8] sm:$0xff]
  %v21 = vld [vmem:[%s1 + $0x10] sm:$0xff]
  %v22 = vld [vmem:[%s1 + $0x18] sm:$0xff]
  %v23 = vld [vmem:[%s1 + $0x20] sm:$0xff]
  %v24 = vld [vmem:[%s1 + $0x28] sm:$0xff]
  %v25 = vld [vmem:[%s1 + $0x30] sm:$0xff]
  %v26 = vld [vmem:[%s1 + $0x38] sm:$0xff]
  %v27 = vld [vmem:[%s1 + $0x40] sm:$0xff]
  %v28 = vld [vmem:[%s1 + $0x48] sm:$0xff]
  %v29 = vld [vmem:[%s1 + $0x50] sm:$0xff]
  %v30 = vld [vmem:[%s1 + $0x58] sm:$0xff]
  %v31 = vld [vmem:[%s1 + $0x60] sm:$0xff]
  %v32 = vld [vmem:[%s1 + $0x68] sm:$0xff]
  %v33 = vld [vmem:[%s1 + $0x70] sm:$0xff]
  %v34 = vld [vmem:[%s1 + $0x78] sm:$0xff]
  %v35 = vld [vmem:[%s0] sm:$0x1f]
  %vm36 = vcmask 39936
  %v38 = vsel %vm36, %v19, 0
  %v41 = vsel %vm36, %v20, 0
  %v44 = vsel %vm36, %v21, 0
  %v47 = vsel %vm36, %v22, 0
  %v50 = vsel %vm36, %v23, 0
  %v53 = vsel %vm36, %v24, 0
  %v56 = vsel %vm36, %v25, 0
  %v59 = vsel %vm36, %v26, 0
  %v62 = vsel %vm36, %v27, 0
  %v65 = vsel %vm36, %v28, 0
  %v68 = vsel %vm36, %v29, 0
  %v71 = vsel %vm36, %v30, 0
  %v74 = vsel %vm36, %v31, 0
  %v77 = vsel %vm36, %v32, 0
  %v80 = vsel %vm36, %v33, 0
  %v83 = vsel %vm36, %v34, 0
  %vm85 = vcmask 1044480
  %v87 = vsel %vm85, %v35, 0
  %89 = vmatprep.subr.mxu0 0.0
  %90 = vmatpush1.msra.mxu0 %v87
  %91 = vmatprep.subr.mxu0 0.0
  %92 = vmatpush1.msra.mxu0 0.0
  %93 = vmatprep.subr.mxu0 0.0
  %94 = vmatpush1.msra.mxu0 0.0
  %95 = vmatprep.subr.mxu0 0.0
  %96 = vmatpush1.msra.mxu0 0.0
  %97 = vmatprep.subr.mxu0 0.0
  %98 = vmatpush1.msra.mxu0 0.0
  %99 = vmatprep.subr.mxu0 0.0
  %100 = vmatpush1.msra.mxu0 0.0
  %101 = vmatprep.subr.mxu0 0.0
  %102 = vmatpush1.msra.mxu0 0.0
  %103 = vmatprep.subr.mxu0 0.0
  %104 = vmatpush1.msra.mxu0 0.0
  %105 = vmatprep.subr.mxu0 0.0
  %106 = vmatpush1.msra.mxu0 0.0
  %107 = vmatprep.subr.mxu0 0.0
  %108 = vmatpush1.msra.mxu0 0.0
  %109 = vmatprep.subr.mxu0 0.0
  %110 = vmatpush1.msra.mxu0 0.0
  %111 = vmatprep.subr.mxu0 0.0
  %112 = vmatpush1.msra.mxu0 0.0
  %113 = vmatprep.subr.mxu0 0.0
  %114 = vmatpush1.msra.mxu0 0.0
  %115 = vmatprep.subr.mxu0 0.0
  %116 = vmatpush1.msra.mxu0 0.0
  %117 = vmatprep.subr.mxu0 0.0
  %118 = vmatpush1.msra.mxu0 0.0
  %119 = vmatprep.subr.mxu0 0.0
  %120 = vmatpush1.msra.mxu0 0.0
  %121 = vmatprep.subr.mxu0 0.0
  %122 = vmatpush1.msra.mxu0 0.0
  %123 = vmatprep.subr.mxu0 0.0
  %124 = vmatpush1.msra.mxu0 0.0
  %125 = vmatprep.subr.mxu0 0.0
  %126 = vmatpush1.msra.mxu0 0.0
  %127 = vmatprep.subr.mxu0 0.0
  %128 = vmatpush1.msra.mxu0 0.0
  %129 = vmatprep.subr.mxu0 0.0
  %130 = vmatpush1.msra.mxu0 0.0
  %131 = vmatprep.subr.mxu0 0.0
  %132 = vmatpush1.msra.mxu0 0.0
  %133 = vmatprep.subr.mxu0 0.0
  %134 = vmatpush1.msra.mxu0 0.0
  %135 = vmatprep.subr.mxu0 0.0
  %136 = vmatpush1.msra.mxu0 0.0
  %137 = vmatprep.subr.mxu0 0.0
  %138 = vmatpush1.msra.mxu0 0.0
  %139 = vmatprep.subr.mxu0 0.0
  %140 = vmatpush1.msra.mxu0 0.0
  %141 = vmatprep.subr.mxu0 0.0
  %142 = vmatpush1.msra.mxu0 0.0
  %143 = vmatprep.subr.mxu0 0.0
  %144 = vmatpush1.msra.mxu0 0.0
  %145 = vmatprep.subr.mxu0 0.0
  %146 = vmatpush1.msra.mxu0 0.0
  %147 = vmatprep.subr.mxu0 0.0
  %148 = vmatpush1.msra.mxu0 0.0
  %149 = vmatprep.subr.mxu0 0.0
  %150 = vmatpush1.msra.mxu0 0.0
  %151 = vmatprep.subr.mxu0 0.0
  %152 = vmatpush1.msra.mxu0 0.0
  %153 = vmatprep.mubr.f32.mxu0 0.0
  %154 = vmatmul.mubr.f32.gmra.mrb[0].mxu0 %v38
  %v155 = vpop.f32.mrb[0].mxu0
  %v156 = vadd.f32 0.0, %v155
  %v157 = vpop.f32.mrb[0].mxu0
  %158 = vmatprep.mubr.f32.mxu0 0.0
  %159 = vmatmul.mubr.f32.gmra.mrb[0].mxu0 %v41
  %v160 = vpop.f32.mrb[0].mxu0
  %v161 = vadd.f32 0.0, %v160
  %v162 = vpop.f32.mrb[0].mxu0
  %163 = vmatprep.mubr.f32.mxu0 0.0
  %164 = vmatmul.mubr.f32.gmra.mrb[0].mxu0 %v44
  %v165 = vpop.f32.mrb[0].mxu0
  %v166 = vadd.f32 0.0, %v165
  %v167 = vpop.f32.mrb[0].mxu0
  %168 = vmatprep.mubr.f32.mxu0 0.0
  %169 = vmatmul.mubr.f32.gmra.mrb[0].mxu0 %v47
  %v170 = vpop.f32.mrb[0].mxu0
  %v171 = vadd.f32 0.0, %v170
  %v172 = vpop.f32.mrb[0].mxu0
  %173 = vmatprep.mubr.f32.mxu0 0.0
  %174 = vmatmul.mubr.f32.gmra.mrb[0].mxu0 %v50
  %v175 = vpop.f32.mrb[0].mxu0
  %v176 = vadd.f32 0.0, %v175
  %v177 = vpop.f32.mrb[0].mxu0
  %178 = vmatprep.mubr.f32.mxu0 0.0
  %179 = vmatmul.mubr.f32.gmra.mrb[0].mxu0 %v53
  %v180 = vpop.f32.mrb[0].mxu0
  %v181 = vadd.f32 0.0, %v180
  %v182 = vpop.f32.mrb[0].mxu0
  %183 = vmatprep.mubr.f32.mxu0 0.0
  %184 = vmatmul.mubr.f32.gmra.mrb[0].mxu0 %v56
  %v185 = vpop.f32.mrb[0].mxu0
  %v186 = vadd.f32 0.0, %v185
  %v187 = vpop.f32.mrb[0].mxu0
  %188 = vmatprep.mubr.f32.mxu0 0.0
  %189 = vmatmul.mubr.f32.gmra.mrb[0].mxu0 %v59
  %v190 = vpop.f32.mrb[0].mxu0
  %v191 = vadd.f32 0.0, %v190
  %v192 = vpop.f32.mrb[0].mxu0
  %193 = vmatprep.mubr.f32.mxu0 0.0
  %194 = vmatmul.mubr.f32.gmra.mrb[0].mxu0 %v62
  %v195 = vpop.f32.mrb[0].mxu0
  %v196 = vadd.f32 0.0, %v195
  %v197 = vpop.f32.mrb[0].mxu0
  %198 = vmatprep.mubr.f32.mxu0 0.0
  %199 = vmatmul.mubr.f32.gmra.mrb[0].mxu0 %v65
  %v200 = vpop.f32.mrb[0].mxu0
  %v201 = vadd.f32 0.0, %v200
  %v202 = vpop.f32.mrb[0].mxu0
  %203 = vmatprep.mubr.f32.mxu0 0.0
  %204 = vmatmul.mubr.f32.gmra.mrb[0].mxu0 %v68
  %v205 = vpop.f32.mrb[0].mxu0
  %v206 = vadd.f32 0.0, %v205
  %v207 = vpop.f32.mrb[0].mxu0
  %208 = vmatprep.mubr.f32.mxu0 0.0
  %209 = vmatmul.mubr.f32.gmra.mrb[0].mxu0 %v71
  %v210 = vpop.f32.mrb[0].mxu0
  %v211 = vadd.f32 0.0, %v210
  %v212 = vpop.f32.mrb[0].mxu0
  %213 = vmatprep.mubr.f32.mxu0 0.0
  %214 = vmatmul.mubr.f32.gmra.mrb[0].mxu0 %v74
  %v215 = vpop.f32.mrb[0].mxu0
  %v216 = vadd.f32 0.0, %v215
  %v217 = vpop.f32.mrb[0].mxu0
  %218 = vmatprep.mubr.f32.mxu0 0.0
  %219 = vmatmul.mubr.f32.gmra.mrb[0].mxu0 %v77
  %v220 = vpop.f32.mrb[0].mxu0
  %v221 = vadd.f32 0.0, %v220
  %v222 = vpop.f32.mrb[0].mxu0
  %223 = vmatprep.mubr.f32.mxu0 0.0
  %224 = vmatmul.mubr.f32.gmra.mrb[0].mxu0 %v80
  %v225 = vpop.f32.mrb[0].mxu0
  %v226 = vadd.f32 0.0, %v225
  %v227 = vpop.f32.mrb[0].mxu0
  %228 = vmatprep.mubr.f32.mxu0 0.0
  %229 = vmatmul.mubr.f32.gmra.mrb[0].mxu0 %v83
  %v230 = vpop.f32.mrb[0].mxu0
  %v231 = vadd.f32 0.0, %v230
  %v232 = vpop.f32.mrb[0].mxu0
  %233 = vdwg.mxu0
  %v234 = vmax.f32 %v156, 0.0
  %v235 = vmax.f32 %v161, 0.0
  %v236 = vmax.f32 %v166, 0.0
  %v237 = vmax.f32 %v171, 0.0
  %v238 = vmax.f32 %v176, 0.0
  %v239 = vmax.f32 %v181, 0.0
  %v240 = vmax.f32 %v186, 0.0
  %v241 = vmax.f32 %v191, 0.0
  %v242 = vmax.f32 %v196, 0.0
  %v243 = vmax.f32 %v201, 0.0
  %v244 = vmax.f32 %v206, 0.0
  %v245 = vmax.f32 %v211, 0.0
  %v246 = vmax.f32 %v216, 0.0
  %v247 = vmax.f32 %v221, 0.0
  %v248 = vmax.f32 %v226, 0.0
  %v249 = vmax.f32 %v231, 0.0
  %v250 = vld [vmem:[%s2] sm:$0x1]
  %v251 = vld [vmem:[#allocation2] sm:$0x1]
  %253 = vset.pattern.permute.xlu0 0
  %254 = vperm.xlu0 %253, %v251
  %v255 = vpop.permute.xlu0 %254
  %v257 = vlaneseq
  %v258 = vshrl.u32 %v257, 7
  %v259 = vsub.s32 0, %v258
  %v260 = vrot.slane %v255, %v259
  %261 = vmatprep.subr.mxu0 0.0
  %262 = vmatpush1.msra.mxu0 %v234
  %263 = vmatprep.subr.mxu0 0.0
  %264 = vmatpush1.msra.mxu0 %v235
  %265 = vmatprep.subr.mxu0 0.0
  %266 = vmatpush1.msra.mxu0 %v236
  %267 = vmatprep.subr.mxu0 0.0
  %268 = vmatpush1.msra.mxu0 %v237
  %269 = vmatprep.subr.mxu0 0.0
  %270 = vmatpush1.msra.mxu0 %v238
  %271 = vmatprep.subr.mxu0 0.0
  %272 = vmatpush1.msra.mxu0 %v239
  %273 = vmatprep.subr.mxu0 0.0
  %274 = vmatpush1.msra.mxu0 %v240
  %275 = vmatprep.subr.mxu0 0.0
  %276 = vmatpush1.msra.mxu0 %v241
  %277 = vmatprep.subr.mxu0 0.0
  %278 = vmatpush1.msra.mxu0 %v242
  %279 = vmatprep.subr.mxu0 0.0
  %280 = vmatpush1.msra.mxu0 %v243
  %281 = vmatprep.subr.mxu0 0.0
  %282 = vmatpush1.msra.mxu0 %v244
  %283 = vmatprep.subr.mxu0 0.0
  %284 = vmatpush1.msra.mxu0 %v245
  %285 = vmatprep.subr.mxu0 0.0
  %286 = vmatpush1.msra.mxu0 %v246
  %287 = vmatprep.subr.mxu0 0.0
  %288 = vmatpush1.msra.mxu0 %v247
  %289 = vmatprep.subr.mxu0 0.0
  %290 = vmatpush1.msra.mxu0 %v248
  %291 = vmatprep.subr.mxu0 0.0
  %292 = vmatpush1.msra.mxu0 %v249
  %293 = vmatprep.subr.mxu0 0.0
  %294 = vmatpush1.msra.mxu0 0.0
  %295 = vmatprep.subr.mxu0 0.0
  %296 = vmatpush1.msra.mxu0 0.0
  %297 = vmatprep.subr.mxu0 0.0
  %298 = vmatpush1.msra.mxu0 0.0
  %299 = vmatprep.subr.mxu0 0.0
  %300 = vmatpush1.msra.mxu0 0.0
  %301 = vmatprep.subr.mxu0 0.0
  %302 = vmatpush1.msra.mxu0 0.0
  %303 = vmatprep.subr.mxu0 0.0
  %304 = vmatpush1.msra.mxu0 0.0
  %305 = vmatprep.subr.mxu0 0.0
  %306 = vmatpush1.msra.mxu0 0.0
  %307 = vmatprep.subr.mxu0 0.0
  %308 = vmatpush1.msra.mxu0 0.0
  %309 = vmatprep.subr.mxu0 0.0
  %310 = vmatpush1.msra.mxu0 0.0
  %311 = vmatprep.subr.mxu0 0.0
  %312 = vmatpush1.msra.mxu0 0.0
  %313 = vmatprep.subr.mxu0 0.0
  %314 = vmatpush1.msra.mxu0 0.0
  %315 = vmatprep.subr.mxu0 0.0
  %316 = vmatpush1.msra.mxu0 0.0
  %317 = vmatprep.subr.mxu0 0.0
  %318 = vmatpush1.msra.mxu0 0.0
  %319 = vmatprep.subr.mxu0 0.0
  %320 = vmatpush1.msra.mxu0 0.0
  %321 = vmatprep.subr.mxu0 0.0
  %322 = vmatpush1.msra.mxu0 0.0
  %323 = vmatprep.subr.mxu0 0.0
  %324 = vmatpush1.msra.mxu0 0.0
  %325 = vmatprep.mubr.f32.mxu0 0.0
  %326 = vmatmul.mubr.f32.gmra.mrb[0].mxu0 %v250
  %v327 = vpop.f32.mrb[0].mxu0
  %v328 = vadd.f32 %v260, %v327
  %v329 = vpop.f32.mrb[0].mxu0
  %330 = vdwg.mxu0
  %v331 = vand.u32 2147483647, %v328
  %v332 = vsub.f32 0.0, %v331
  %v333 = vmul.f32 %v332, 1.442695
  %v334 = vpow.pop %v333
  %v335 = vadd.f32 %v334, 1.0
  %v336 = vrcp.pop %v335
  %v337 = vmul.f32 1.0, %v336
  %vm338 = vcmp.ge.f32.partialorder %v328, 0.0
  %v339 = vsub.f32 1.0, %v337
  %v340 = vsel %vm338, %v337, %v339
  %v341 = vsub.f32 1.0, %v340
  %v343 = vrot.slane %v341, 7
  %vm345 = vcmask 1040384
  %v346 = vsel %vm345, %v340, %v343
  %347 = vst [vmem:[%s4] sm:$0x3] %v346
  // Predicated region
  $region18: #{policy_forward.1} parent=0 // pred_check
    _
  $region19: #{policy_forward.1} parent=0 // pred_check_branch
    %349 = sbr.rel (0) target = $region21
  $region20: #{policy_forward.1} parent=0 // pred_region
    _
  $region21: #{policy_forward.1} parent=0 // pred_fallthru
    _
  // Predicated region
  $region22: #{policy_forward.1} parent=0 // pred_check
    _
  $region23: #{policy_forward.1} parent=0 // pred_check_branch
    %351 = sbr.rel (0) target = $region25
  $region24: #{policy_forward.1} parent=0 // pred_region
    _
  $region25: #{policy_forward.1} parent=0 // pred_fallthru
    _

</llo_original>
